<compile_context>
chip_gen: v7x
topology: tpu7x:2x2x1
jax: 0.10.0
libtpu: 0.0.40
codegen_flags: <defaults>
</compile_context>

<pallas_src>
import functools

import jax
import jax.numpy as jnp
from jax.experimental import pallas as pl
from jax.experimental.pallas import tpu as pltpu


def _patch_embed_norm_kernel(x_ref, w_ref, b_ref, o_ref, *, eps):
    # x_ref: (C, TL)   w_ref / b_ref: (C, 1) f32   o_ref: (TL, C)
    C, TL = x_ref.shape
    strip = 128 if TL % 128 == 0 else TL   # tiny non-aligned L -> one strip
    n_strips = TL // strip
    inv_c = 1.0 / C

    # Hoist parameter loads out of the strip loop (already f32 from wrapper).
    w = w_ref[...]                         # (C, 1) -> lane-broadcast in use
    b = b_ref[...]

    def body(i, carry):
        col = pl.multiple_of(i * strip, strip)
        xs = x_ref[:, pl.ds(col, strip)].astype(jnp.float32)      # (C, strip)
        # Single pass over the strip: sum and sum-of-squares.
        s1 = jnp.sum(xs, axis=0, keepdims=True)                   # (1, strip)
        s2 = jnp.sum(xs * xs, axis=0, keepdims=True)              # (1, strip)
        mean = s1 * inv_c
        var = s2 * inv_c - mean * mean                            # E[x^2]-m^2
        inv = jax.lax.rsqrt(var + eps)                            # EUP slot
        # Fused normalize + affine; cast BEFORE the transpose (halves XLU
        # traffic / store width for sub-f32 outputs).
        y = ((xs - mean) * inv) * w + b                           # (C, strip)
        o_ref[pl.ds(col, strip), :] = y.astype(o_ref.dtype).T     # (strip, C)
        return carry

    jax.lax.fori_loop(0, n_strips, body, 0, unroll=True)


def _patch_embed_plain_kernel(x_ref, o_ref):
    # norm_layer is None: pure flatten + transpose of one (C, TL) tile.
    o_ref[...] = x_ref[...].astype(o_ref.dtype).T


def _choose_spatial_tile(L, max_tile):
    """Fixed 128-multiple spatial tile; grid uses pl.cdiv (ragged last block).

    Ragged reads only pollute lanes whose output rows are dropped on the
    clipped writeback, so correctness is unaffected.  Only for a tiny,
    non-128-aligned L do we fall back to a single full-extent block (legal:
    block dim == full array dim, and trivially fits VMEM).
    """
    max_tile = max(128, (max_tile // 128) * 128)
    tl = min(((L + 127) // 128) * 128, max_tile)
    if tl > L:
        tl = L
    return tl


def patch_embed_forward(x, weight=None, bias=None, eps=1e-5, max_tile=2048):
    """x: (B, C, H, W). Returns (B, H*W, C). If weight/bias are given, applies
    LayerNorm over the embed dim exactly like nn.LayerNorm(embed_dim)."""
    B, C, H, W = x.shape
    L = H * W
    x_flat = x.reshape(B, C, L)  # free row-major glue reshape only

    TL = _choose_spatial_tile(L, max_tile)
    num_l = pl.cdiv(L, TL)

    out_shape = jax.ShapeDtypeStruct((B, L, C), x.dtype)
    x_spec = pl.BlockSpec((pl.Squeezed(), C, TL), lambda b, l: (b, 0, l))
    # TODO(synk): for narrow C (<128) the output stores are lane-masked; only
    # worth revisiting on v7x (in-core bound) — on v5e/v6e the contiguous
    # per-block HBM write hides the masked stores, and padding C would add
    # write traffic to a memory-bound op.
    o_spec = pl.BlockSpec((pl.Squeezed(), TL, C), lambda b, l: (b, l, 0))
    cparams = pltpu.CompilerParams(
        dimension_semantics=("parallel", "parallel"),
        vmem_limit_bytes=48 * 1024 * 1024)

    hbm_bytes = 2 * B * C * L * x.dtype.itemsize

    if weight is None:
        # TODO(synk): a standalone flatten+transpose pays a full HBM read +
        # write with zero math; fuse into the consumer when possible.
        return pl.pallas_call(
            _patch_embed_plain_kernel,
            out_shape=out_shape,
            grid_spec=pltpu.PrefetchScalarGridSpec(
                num_scalar_prefetch=0,
                grid=(B, num_l),
                in_specs=[x_spec],
                out_specs=o_spec,
            ),
            compiler_params=cparams,
            cost_estimate=pl.CostEstimate(
                flops=0, transcendentals=0, bytes_accessed=hbm_bytes),
        )(x_flat)

    # Weight/bias as (C, 1) f32 so they broadcast over the lane axis in-kernel.
    w2 = weight.reshape(C, 1).astype(jnp.float32)
    b2 = bias.reshape(C, 1).astype(jnp.float32)
    p_spec = pl.BlockSpec((C, 1), lambda b, l: (0, 0))
    return pl.pallas_call(
        functools.partial(_patch_embed_norm_kernel, eps=eps),
        out_shape=out_shape,
        grid_spec=pltpu.PrefetchScalarGridSpec(
            num_scalar_prefetch=0,
            grid=(B, num_l),
            in_specs=[x_spec, p_spec, p_spec],
            out_specs=o_spec,
        ),
        compiler_params=cparams,
        cost_estimate=pl.CostEstimate(
            flops=10 * B * C * L, transcendentals=B * L,
            bytes_accessed=hbm_bytes + 2 * C * 4),
    )(x_flat, w2, b2)


if __name__ == "__main__":
    # Small shapes consistent with the module: B=2, embed_dim=32, H=W=16.
    B, C, H, W = 2, 32, 16, 16
    key = jax.random.PRNGKey(0)
    kx, kw, kb = jax.random.split(key, 3)
    x = jax.random.normal(kx, (B, C, H, W), dtype=jnp.float32)
    # Deterministic LayerNorm params (synthetic; nn.LayerNorm would init 1/0).
    weight = 1.0 + 0.1 * jax.random.normal(kw, (C,), dtype=jnp.float32)
    bias = 0.1 * jax.random.normal(kb, (C,), dtype=jnp.float32)

    def ref_fn(xi, w=None, bvec=None, eps=1e-5):
        bb, cc, hh, ww = xi.shape
        t = jnp.transpose(xi.reshape(bb, cc, hh * ww), (0, 2, 1))
        if w is None:
            return t
        mu = t.mean(-1, keepdims=True)
        var = ((t - mu) ** 2).mean(-1, keepdims=True)
        return (t - mu) / jnp.sqrt(var + eps) * w + bvec

    # LayerNorm path, small tile -> tiled (B, L//TL) = (2, 2) grid.
    out = jax.block_until_ready(
        patch_embed_forward(x, weight, bias, max_tile=128))
    assert out.shape == (B, H * W, C)
    assert jnp.allclose(out, ref_fn(x, weight, bias), atol=2e-5, rtol=1e-5)

    # LayerNorm path, default (largest-fitting) tile.
    out_big = jax.block_until_ready(patch_embed_forward(x, weight, bias))
    assert jnp.allclose(out_big, ref_fn(x, weight, bias), atol=2e-5, rtol=1e-5)

    # norm_layer=None path (pure flatten + transpose).
    out_plain = jax.block_until_ready(patch_embed_forward(x, max_tile=128))
    assert jnp.allclose(out_plain, ref_fn(x))

    # Non-128-aligned spatial size -> cdiv grid with a ragged last block.
    x_odd = jax.random.normal(kx, (B, C, 12, 12), dtype=jnp.float32)
    out_odd = jax.block_until_ready(
        patch_embed_forward(x_odd, weight, bias, max_tile=128))
    assert out_odd.shape == (B, 144, C)
    assert jnp.allclose(out_odd, ref_fn(x_odd, weight, bias),
                        atol=2e-5, rtol=1e-5)

    print("KERNEL_OK")
</pallas_src>

<mosaic_0001>
module attributes {stable_mosaic.version = 11 : i64} {
  func.func @_patch_embed_norm_kernel(%arg0: i32, %arg1: i32, %arg2: memref<1x32x128xf32, #tpu.memory_space<vmem>>, %arg3: memref<32x1xf32, #tpu.memory_space<vmem>>, %arg4: memref<32x1xf32, #tpu.memory_space<vmem>>, %arg5: memref<1x128x32xf32, #tpu.memory_space<vmem>>) attributes {dimension_semantics = [#tpu.dimension_semantics<parallel>, #tpu.dimension_semantics<parallel>], iteration_bounds = array<i64: 2, 2>, scalar_prefetch = 0 : i64, scratch_operands = 0 : i64, tpu.core_type = #tpu.core_type<tc>, window_params = [{transform_indices = @transform_0, window_bounds = array<i64: 1, 32, 128>}, {pipeline_mode = #tpu.pipeline_mode<synchronous>, transform_indices = @transform_1, window_bounds = array<i64: 32, 1>}, {pipeline_mode = #tpu.pipeline_mode<synchronous>, transform_indices = @transform_2, window_bounds = array<i64: 32, 1>}, {transform_indices = @transform_3, window_bounds = array<i64: 1, 128, 32>}]} {
    %c0 = arith.constant 0 : index
    %c0_0 = arith.constant 0 : index
    %0 = vector.load %arg3[%c0, %c0_0] : memref<32x1xf32, #tpu.memory_space<vmem>>, vector<32x1xf32>
    %c0_1 = arith.constant 0 : index
    %c0_2 = arith.constant 0 : index
    %1 = vector.load %arg4[%c0_1, %c0_2] : memref<32x1xf32, #tpu.memory_space<vmem>>, vector<32x1xf32>
    %c0_i32 = arith.constant 0 : i32
    %c128_i32 = arith.constant 128 : i32
    %2 = arith.muli %c0_i32, %c128_i32 : i32
    %3 = tpu.assume_multiple %2, 128 : i32
    %c0_3 = arith.constant 0 : index
    %c0_4 = arith.constant 0 : index
    %4 = arith.index_cast %3 : i32 to index
    %5 = vector.load %arg2[%c0_3, %c0_4, %4] : memref<1x32x128xf32, #tpu.memory_space<vmem>>, vector<1x32x128xf32>
    %6 = vector.shape_cast %5 : vector<1x32x128xf32> to vector<32x128xf32>
    %cst = arith.constant dense<0.000000e+00> : vector<128xf32>
    %7 = vector.multi_reduction <add>, %6, %cst [0] : vector<32x128xf32> to vector<128xf32>
    %8 = vector.shape_cast %7 : vector<128xf32> to vector<1x128xf32>
    %9 = arith.mulf %6, %6 : vector<32x128xf32>
    %cst_5 = arith.constant dense<0.000000e+00> : vector<128xf32>
    %10 = vector.multi_reduction <add>, %9, %cst_5 [0] : vector<32x128xf32> to vector<128xf32>
    %11 = vector.shape_cast %10 : vector<128xf32> to vector<1x128xf32>
    %cst_6 = arith.constant 3.125000e-02 : f32
    %12 = vector.broadcast %cst_6 : f32 to vector<1x128xf32>
    %13 = arith.mulf %8, %12 : vector<1x128xf32>
    %cst_7 = arith.constant 3.125000e-02 : f32
    %14 = vector.broadcast %cst_7 : f32 to vector<1x128xf32>
    %15 = arith.mulf %11, %14 : vector<1x128xf32>
    %16 = arith.mulf %13, %13 : vector<1x128xf32>
    %17 = arith.subf %15, %16 : vector<1x128xf32>
    %cst_8 = arith.constant 9.99999974E-6 : f32
    %18 = vector.broadcast %cst_8 : f32 to vector<1x128xf32>
    %19 = arith.addf %17, %18 : vector<1x128xf32>
    %20 = math.rsqrt %19 : vector<1x128xf32>
    %21 = vector.broadcast %13 : vector<1x128xf32> to vector<32x128xf32>
    %22 = arith.subf %6, %21 : vector<32x128xf32>
    %23 = vector.broadcast %20 : vector<1x128xf32> to vector<32x128xf32>
    %24 = arith.mulf %22, %23 : vector<32x128xf32>
    %25 = vector.broadcast %0 : vector<32x1xf32> to vector<32x128xf32>
    %26 = arith.mulf %24, %25 : vector<32x128xf32>
    %27 = vector.broadcast %1 : vector<32x1xf32> to vector<32x128xf32>
    %28 = arith.addf %26, %27 : vector<32x128xf32>
    %29 = tpu.transpose %28, [1, 0] : vector<32x128xf32> -> vector<128x32xf32>
    %c0_9 = arith.constant 0 : index
    %30 = arith.index_cast %3 : i32 to index
    %c0_10 = arith.constant 0 : index
    %31 = vector.load %arg5[%c0_9, %30, %c0_10] : memref<1x128x32xf32, #tpu.memory_space<vmem>>, vector<1x128x32xf32>
    %32 = vector.shape_cast %31 : vector<1x128x32xf32> to vector<128x32xf32>
    %33 = vector.shape_cast %29 : vector<128x32xf32> to vector<1x128x32xf32>
    tpu.vector_store %arg5[%c0_9, %30, %c0_10], %33 {strides = array<i32>} : memref<1x128x32xf32, #tpu.memory_space<vmem>>, vector<1x128x32xf32>,
    %c1_i32 = arith.constant 1 : i32
    return
  }
  func.func @transform_0(%arg0: i32, %arg1: i32) -> (i32, i32, i32) {
    %c0_i32 = arith.constant 0 : i32
    %c0_i32_0 = arith.constant 0 : i32
    return %arg0, %c0_i32, %arg1 : i32, i32, i32
  }
  func.func @transform_1(%arg0: i32, %arg1: i32) -> (i32, i32) {
    %c0_i32 = arith.constant 0 : i32
    %c0_i32_0 = arith.constant 0 : i32
    %c0_i32_1 = arith.constant 0 : i32
    return %c0_i32, %c0_i32_0 : i32, i32
  }
  func.func @transform_2(%arg0: i32, %arg1: i32) -> (i32, i32) {
    %c0_i32 = arith.constant 0 : i32
    %c0_i32_0 = arith.constant 0 : i32
    %c0_i32_1 = arith.constant 0 : i32
    return %c0_i32, %c0_i32_0 : i32, i32
  }
  func.func @transform_3(%arg0: i32, %arg1: i32) -> (i32, i32, i32) {
    %c0_i32 = arith.constant 0 : i32
    %c0_i32_0 = arith.constant 0 : i32
    return %arg0, %arg1, %c0_i32 : i32, i32, i32
  }
}

</mosaic_0001>

<llo_original>
// kernel: tpu_custom_call.1
$region0: #{tpu_custom_call.1}
  #allocation0 [shape = 'u32[]', space=smem, size = 0x4, offset = 0x4, fixed_abs, tag = 'smem constant byte address 0x4 - core index']
  #allocation1 [shape = 'u32[144,128]{1,0:T(1,128)}', space=vmem, size = 0x12000, scoped, tag = 'internal scratch']
  %s0 = inlined_call_operand.hbm [shape: f32[2,32,256], index: 0, kind: input, shape index: {}]
  %s1 = inlined_call_operand.vmem [shape: f32[32,1], index: 1, kind: input, shape index: {}]
  %s2 = inlined_call_operand.vmem [shape: f32[32,1], index: 2, kind: input, shape index: {}]
  %s3 = inlined_call_operand.vmem [shape: f32[2,256,32], index: 3, kind: output, shape index: {}]
  %s4 = sld [smem:[#allocation0]]
  $region49: #{tpu_custom_call.1} parent=0
    _
  %s6 = ssub.s32 1, %s4
  %s7 = scalar_select 0, %s6, %s4
  $region1: #{tpu_custom_call.1} parent=0
    #allocation2 [shape = 'u8[32768]{0}', space=vmem, size = 0x8000, scoped, tag = 'input window, operand 0']
    #allocation3 [shape = 's32[2]{0}', space=sflag, size = 0x8, scoped, tag = 'scoped memory for tpu_custom_call.1']
    %8 = vsyncpa [#allocation3], 0
    %s9 = scalar_lea.sflag [#allocation3], 1
    %10 = vsyncpa %s9, 0
    loop: start=0, step=1, limit=6
    $region2: #{tpu_custom_call.1} parent=1 // loop_pre_header
      _
    $region3: #{tpu_custom_call.1} parent=1 // loop_header
      %s12 = sphi 0, %s16
      %p13 = scmp.ge.s32.totalorder %s12, 6
      %s19 = sphi 0, %s31
      %s20 = sphi 0, %s27
      %s21 = sphi 0, %s19
      %s22 = sphi 0, %s20
      %s23 = sphi 0, %s21
      %s24 = sphi 0, %s22
      %s36 = sphi 0, %s38
      %s39 = sphi 0, %s36
      %s40 = sphi 0, %s39
      %s56 = sphi 0, %s40
      %s60 = sphi 0, %s60
      %s62 = sphi 0, %s60
      %s63 = sphi 0, %s62
      %s77 = sphi 0, %s63
      %s81 = sphi 0, %s81
      %s83 = sphi 0, %s81
      %s84 = sphi 0, %s83
      %s98 = sphi 0, %s84
      %s106 = sphi 0, %s108
      %s109 = sphi 0, %s106
      %s110 = sphi 0, %s109
      %s126 = sphi 0, %s110
    $region4: #{tpu_custom_call.1} parent=1 // loop_header_branch
      %15 = sbr.rel (%p13) target = $region8
    $region5: #{tpu_custom_call.1} parent=1 // loop_body
      %s17 = ssub.s32 %s12, 1
      %s18 = ssub.s32 %s12, 2
      %s25 = sadd.s32 1, %s20
      %p26 = scmp.ge.s32.totalorder %s25, 2
      %s27 = scalar_select %p26, 0, %s25
      %s28 = sadd.s32 1, %s19
      %s29 = scalar_select %p26, %s28, %s19
      %p30 = scmp.ge.s32.totalorder %s29, 2
      %s31 = scalar_select %p30, 0, %s29
      %s32 = ssub.s32 %s19, %s31
      %s33 = ssub.s32 %s20, %s27
      %s34 = sor.u32 %s32, %s33
      %p35 = scmp.eq.s32.totalorder %s34, 0
      %s37 = sadd.s32 %s36, 1
      %s38 = scalar_select %p35, %s36, %s37
      %p41 = pneg %p35
      %p42 = scmp.eq.s32.totalorder %s12, 3
      %p43 = por %p41, %p42
      %p44 = scmp.ne.s32.totalorder %s36, %s39
      %p45 = scmp.eq.s32.totalorder %s12, 0
      %p46 = por %p44, %p45
      %p47 = scmp.ne.s32.totalorder %s36, %s39
      %p48 = scmp.eq.s32.totalorder %s17, 3
      %p49 = por %p47, %p48
      %p50 = scmp.ne.s32.totalorder %s39, %s40
      %p51 = scmp.eq.s32.totalorder %s17, 0
      %p52 = por %p50, %p51
      %p53 = scmp.ne.s32.totalorder %s39, %s40
      %p54 = scmp.eq.s32.totalorder %s18, 3
      %p55 = por %p53, %p54
      %p57 = scmp.ne.s32.totalorder %s40, %s56
      %p58 = scmp.eq.s32.totalorder %s18, 0
      %p59 = por %p57, %p58
      %s61 = sadd.s32 %s60, 1
      %p64 = scmp.eq.s32.totalorder %s12, 3
      %p65 = scmp.ne.s32.totalorder %s60, %s62
      %p66 = scmp.eq.s32.totalorder %s12, 0
      %p67 = por %p65, %p66
      %p68 = scmp.ne.s32.totalorder %s60, %s62
      %p69 = scmp.eq.s32.totalorder %s17, 3
      %p70 = por %p68, %p69
      %p71 = scmp.ne.s32.totalorder %s62, %s63
      %p72 = scmp.eq.s32.totalorder %s17, 0
      %p73 = por %p71, %p72
      %p74 = scmp.ne.s32.totalorder %s62, %s63
      %p75 = scmp.eq.s32.totalorder %s18, 3
      %p76 = por %p74, %p75
      %p78 = scmp.ne.s32.totalorder %s63, %s77
      %p79 = scmp.eq.s32.totalorder %s18, 0
      %p80 = por %p78, %p79
      %s82 = sadd.s32 %s81, 1
      %p85 = scmp.eq.s32.totalorder %s12, 3
      %p86 = scmp.ne.s32.totalorder %s81, %s83
      %p87 = scmp.eq.s32.totalorder %s12, 0
      %p88 = por %p86, %p87
      %p89 = scmp.ne.s32.totalorder %s81, %s83
      %p90 = scmp.eq.s32.totalorder %s17, 3
      %p91 = por %p89, %p90
      %p92 = scmp.ne.s32.totalorder %s83, %s84
      %p93 = scmp.eq.s32.totalorder %s17, 0
      %p94 = por %p92, %p93
      %p95 = scmp.ne.s32.totalorder %s83, %s84
      %p96 = scmp.eq.s32.totalorder %s18, 3
      %p97 = por %p95, %p96
      %p99 = scmp.ne.s32.totalorder %s84, %s98
      %p100 = scmp.eq.s32.totalorder %s18, 0
      %p101 = por %p99, %p100
      %s102 = ssub.s32 %s19, %s31
      %s103 = ssub.s32 %s20, %s27
      %s104 = sor.u32 %s102, %s103
      %p105 = scmp.eq.s32.totalorder %s104, 0
      %s107 = sadd.s32 %s106, 1
      %s108 = scalar_select %p105, %s106, %s107
      %p111 = pneg %p105
      %p112 = scmp.eq.s32.totalorder %s12, 3
      %p113 = por %p111, %p112
      %p114 = scmp.ne.s32.totalorder %s106, %s109
      %p115 = scmp.eq.s32.totalorder %s12, 0
      %p116 = por %p114, %p115
      %p117 = scmp.ne.s32.totalorder %s106, %s109
      %p118 = scmp.eq.s32.totalorder %s17, 3
      %p119 = por %p117, %p118
      %p120 = scmp.ne.s32.totalorder %s109, %s110
      %p121 = scmp.eq.s32.totalorder %s17, 0
      %p122 = por %p120, %p121
      %p123 = scmp.ne.s32.totalorder %s109, %s110
      %p124 = scmp.eq.s32.totalorder %s18, 3
      %p125 = por %p123, %p124
      %p127 = scmp.ne.s32.totalorder %s110, %s126
      %p128 = scmp.eq.s32.totalorder %s18, 0
      %p129 = por %p127, %p128
      %p130 = scmp.le.s32.totalorder 1, %s12
      %p131 = scmp.lt.s32.totalorder %s12, 5
      %p132 = pnand %p130, %p131
      %p133 = pneg %p132
      // Predicated region
      $region9: #{tpu_custom_call.1} parent=5 // pred_check
        _
      $region10: #{tpu_custom_call.1} parent=5 // pred_check_branch
        %135 = sbr.rel (%p132) target = $region12
      $region11: #{tpu_custom_call.1} parent=5 // pred_region
        %s136 = ssub.s32 %s12, 1
        // Predicated region
        $region13: #{tpu_custom_call.1} parent=11 // pred_check
          %p137 = pneg %p73
        $region14: #{tpu_custom_call.1} parent=11 // pred_check_branch
          %139 = sbr.rel (%p137) target = $region16
        $region15: #{tpu_custom_call.1} parent=11 // pred_region
          _
        $region16: #{tpu_custom_call.1} parent=11 // pred_fallthru
          _
        // Predicated region
        $region17: #{tpu_custom_call.1} parent=11 // pred_check
          %p140 = pneg %p94
        $region18: #{tpu_custom_call.1} parent=11 // pred_check_branch
          %142 = sbr.rel (%p140) target = $region20
        $region19: #{tpu_custom_call.1} parent=11 // pred_region
          _
        $region20: #{tpu_custom_call.1} parent=11 // pred_fallthru
          _
      $region12: #{tpu_custom_call.1} parent=5 // pred_fallthru
        _
      %p143 = scmp.lt.s32.totalorder %s12, 4
      // Predicated region
      $region21: #{tpu_custom_call.1} parent=5 // pred_check
        %p144 = pneg %p143
      $region22: #{tpu_custom_call.1} parent=5 // pred_check_branch
        %146 = sbr.rel (%p144) target = $region24
      $region23: #{tpu_custom_call.1} parent=5 // pred_region
        // Predicated region
        $region25: #{tpu_custom_call.1} parent=23 // pred_check
          %p147 = pneg %p46
        $region26: #{tpu_custom_call.1} parent=23 // pred_check_branch
          %149 = sbr.rel (%p147) target = $region28
        $region27: #{tpu_custom_call.1} parent=23 // pred_region
          %s150 = sand.u32 %s36, 1
          %s151 = scalar_lea.sflag [#allocation3], %s150
          %s152 = sand.u32 %s36, 1
          %s153 = smul.addr %s152, 32
          %s154 = scalar_lea.vmem [#allocation2], %s153
          %s156 = ssub.s32 512, 512
          %157 = vsyncadd %s151, %s156
          %s158 = smul.addr %s19, 8
          %s159 = sadd.s32 %s20, %s158
          %s160 = smul.addr %s159, 128
          %s161 = scalar_lea.hbm %s0, %s160
          %s162 = sshll.u32 %s154, 4
          %s163 = int_to_ptr.vmem [resolvable:$true] %s162
          %168 = dma.hbm_to_vmem [thread:$0]  %s161, 512, %s163, %s151, 256, 128, 8
        $region28: #{tpu_custom_call.1} parent=23 // pred_fallthru
          _
      $region24: #{tpu_custom_call.1} parent=5 // pred_fallthru
        _
      %p169 = scmp.le.s32.totalorder 1, %s12
      %p170 = scmp.lt.s32.totalorder %s12, 5
      %p171 = pnand %p169, %p170
      %p172 = pneg %p171
      // Predicated region
      $region29: #{tpu_custom_call.1} parent=5 // pred_check
        _
      $region30: #{tpu_custom_call.1} parent=5 // pred_check_branch
        %174 = sbr.rel (%p171) target = $region32
      $region31: #{tpu_custom_call.1} parent=5 // pred_region
        %s175 = ssub.s32 %s12, 1
        %s176 = sand.u32 %s39, 1
        %s177 = scalar_lea.sflag [#allocation3], %s176
        %s178 = sand.u32 %s39, 1
        %s179 = smul.addr %s178, 32
        %s180 = scalar_lea.vmem [#allocation2], %s179
        // Predicated region
        $region33: #{tpu_custom_call.1} parent=31 // pred_check
          %p181 = pneg %p52
        $region34: #{tpu_custom_call.1} parent=31 // pred_check_branch
          %183 = sbr.rel (%p181) target = $region36
        $region35: #{tpu_custom_call.1} parent=31 // pred_region
          %184 = dma.done %s177, 512
        $region36: #{tpu_custom_call.1} parent=31 // pred_fallthru
          _
        %s185 = sand.u32 %s39, 1
        %s186 = scalar_lea.sflag [#allocation3], %s185
        %s187 = sand.u32 %s39, 1
        %s188 = smul.addr %s187, 32
        %s189 = scalar_lea.vmem [#allocation2], %s188
        %p190 = pneg %p52
        %p191 = pneg %p49
        %p192 = pneg %p73
        %p193 = pneg %p70
        %p194 = pneg %p94
        %p195 = pneg %p91
        %p196 = pneg %p122
        %p197 = pneg %p119
        %s198 = smul.u32 16, %s22
        %p199 = scmp.lt.s32.totalorder %s21, 1
        %s200 = scalar_select %p199, %s21, 1
        %p201 = scmp.lt.s32.totalorder %s198, 31
        %s202 = scalar_select %p201, %s198, 31
        %s203 = smul.addr %s200, 32
        %s204 = sadd.s32 %s202, %s203
        %s205 = smul.addr %s204, 8
        %s206 = scalar_lea.vmem %s3, %s205
        %s207 = smul.u32 16, %s22
        %p208 = scmp.lt.s32.totalorder %s21, 1
        %s209 = scalar_select %p208, %s21, 1
        %p210 = scmp.lt.s32.totalorder %s207, 31
        %s211 = scalar_select %p210, %s207, 31
        %s212 = smul.addr %s209, 32
        %s213 = sadd.s32 %s211, %s212
        %s214 = smul.addr %s213, 8
        %s215 = scalar_lea.vmem %s3, %s214
        %s216 = smul.u32 16, %s22
        %v217 = vld [vmem:[%s1] sm:$0xff]
        %v218 = vld [vmem:[%s1 + $0x8] sm:$0xff]
        %v219 = vld [vmem:[%s1 + $0x10] sm:$0xff]
        %v220 = vld [vmem:[%s1 + $0x18] sm:$0xff]
        %v221 = vld [vmem:[%s2] sm:$0xff]
        %v222 = vld [vmem:[%s2 + $0x8] sm:$0xff]
        %v223 = vld [vmem:[%s2 + $0x10] sm:$0xff]
        %v224 = vld [vmem:[%s2 + $0x18] sm:$0xff]
        %v225 = vld [vmem:[%s180] sm:$0xff]
        %v226 = vld [vmem:[%s180 + $0x8] sm:$0xff]
        %v227 = vld [vmem:[%s180 + $0x10] sm:$0xff]
        %v228 = vld [vmem:[%s180 + $0x18] sm:$0xff]
        %v229 = vadd.f32 %v225, %v226
        %v230 = vadd.f32 %v229, %v227
        %v231 = vadd.f32 %v230, %v228
        %v232 = vrot.slane %v231, 4
        %v233 = vadd.f32 %v231, %v232
        %v234 = vrot.slane %v233, 2
        %v235 = vadd.f32 %v233, %v234
        %v236 = vrot.slane %v235, 1
        %v237 = vadd.f32 %v235, %v236
        %v238 = vmul.f32 %v225, %v225
        %v239 = vmul.f32 %v226, %v226
        %v240 = vmul.f32 %v227, %v227
        %v241 = vmul.f32 %v228, %v228
        %v242 = vadd.f32 %v238, %v239
        %v243 = vadd.f32 %v242, %v240
        %v244 = vadd.f32 %v243, %v241
        %v245 = vrot.slane %v244, 4
        %v246 = vadd.f32 %v244, %v245
        %v247 = vrot.slane %v246, 2
        %v248 = vadd.f32 %v246, %v247
        %v249 = vrot.slane %v248, 1
        %v250 = vadd.f32 %v248, %v249
        %v251 = vmul.f32 %v237, 0.03125
        %v252 = vmul.f32 %v250, 0.03125
        %v253 = vmul.f32 %v251, %v251
        %v254 = vsub.f32 %v252, %v253
        %v255 = vadd.f32 %v254, 1e-05
        %v256 = vrsqrt.pop %v255
        %v257 = vsub.f32 %v225, %v251
        %v258 = vsub.f32 %v226, %v251
        %v259 = vsub.f32 %v227, %v251
        %v260 = vsub.f32 %v228, %v251
        %v261 = vmul.f32 %v257, %v256
        %v262 = vmul.f32 %v258, %v256
        %v263 = vmul.f32 %v259, %v256
        %v264 = vmul.f32 %v260, %v256
        %266 = vset.pattern.permute.xlu0 0
        %267 = vperm.xlu0 %266, %v217
        %v268 = vpop.permute.xlu0 %267
        %271 = vset.pattern.permute.xlu0 0
        %272 = vperm.xlu0 %271, %v218
        %v273 = vpop.permute.xlu0 %272
        %276 = vset.pattern.permute.xlu0 0
        %277 = vperm.xlu0 %276, %v219
        %v278 = vpop.permute.xlu0 %277
        %281 = vset.pattern.permute.xlu0 0
        %282 = vperm.xlu0 %281, %v220
        %v283 = vpop.permute.xlu0 %282
        %v285 = vmul.f32 %v261, %v268
        %v286 = vmul.f32 %v262, %v273
        %v287 = vmul.f32 %v263, %v278
        %v288 = vmul.f32 %v264, %v283
        %290 = vset.pattern.permute.xlu0 0
        %291 = vperm.xlu0 %290, %v221
        %v292 = vpop.permute.xlu0 %291
        %295 = vset.pattern.permute.xlu0 0
        %296 = vperm.xlu0 %295, %v222
        %v297 = vpop.permute.xlu0 %296
        %300 = vset.pattern.permute.xlu0 0
        %301 = vperm.xlu0 %300, %v223
        %v302 = vpop.permute.xlu0 %301
        %305 = vset.pattern.permute.xlu0 0
        %306 = vperm.xlu0 %305, %v224
        %v307 = vpop.permute.xlu0 %306
        %v309 = vadd.f32 %v285, %v292
        %v310 = vadd.f32 %v286, %v297
        %v311 = vadd.f32 %v287, %v302
        %v312 = vadd.f32 %v288, %v307
        %313 = vxpose.xlu0.b32.start [1/16] %v309, 128
        %314 = vxpose.xlu0.b32.cont [2/16] %v310, 128
        %315 = vxpose.xlu0.b32.cont [3/16] %v311, 128
        %316 = vxpose.xlu0.b32.cont [4/16] %v312, 128
        %317 = vxpose.xlu0.b32.cont [5/16] 0.0, 128
        %318 = vxpose.xlu0.b32.cont [6/16] 0.0, 128
        %319 = vxpose.xlu0.b32.cont [7/16] 0.0, 128
        %320 = vxpose.xlu0.b32.cont [8/16] 0.0, 128
        %321 = vxpose.xlu0.b32.cont [9/16] 0.0, 128
        %322 = vxpose.xlu0.b32.cont [10/16] 0.0, 128
        %323 = vxpose.xlu0.b32.cont [11/16] 0.0, 128
        %324 = vxpose.xlu0.b32.cont [12/16] 0.0, 128
        %325 = vxpose.xlu0.b32.cont [13/16] 0.0, 128
        %326 = vxpose.xlu0.b32.cont [14/16] 0.0, 128
        %327 = vxpose.xlu0.b32.cont [15/16] 0.0, 128
        %328 = vxpose.xlu0.b32.end [16/16] 0.0, 128
        %v329 = vpop.trf.xlu0
        %v330 = vpop.trf.xlu0
        %v331 = vpop.trf.xlu0
        %v332 = vpop.trf.xlu0
        %v333 = vpop.trf.xlu0
        %v334 = vpop.trf.xlu0
        %v335 = vpop.trf.xlu0
        %v336 = vpop.trf.xlu0
        %v337 = vpop.trf.xlu0
        %v338 = vpop.trf.xlu0
        %v339 = vpop.trf.xlu0
        %v340 = vpop.trf.xlu0
        %v341 = vpop.trf.xlu0
        %v342 = vpop.trf.xlu0
        %v343 = vpop.trf.xlu0
        %v344 = vpop.trf.xlu0
        %vm345 = vcmask 261120
        %346 = vst.msk [vmem:[%s215] sm:$0xff] %vm345, %v329
        %347 = vst.msk [vmem:[%s215 + $0x8] sm:$0xff] %vm345, %v330
        %348 = vst.msk [vmem:[%s215 + $0x10] sm:$0xff] %vm345, %v331
        %349 = vst.msk [vmem:[%s215 + $0x18] sm:$0xff] %vm345, %v332
        %350 = vst.msk [vmem:[%s215 + $0x20] sm:$0xff] %vm345, %v333
        %351 = vst.msk [vmem:[%s215 + $0x28] sm:$0xff] %vm345, %v334
        %352 = vst.msk [vmem:[%s215 + $0x30] sm:$0xff] %vm345, %v335
        %353 = vst.msk [vmem:[%s215 + $0x38] sm:$0xff] %vm345, %v336
        %354 = vst.msk [vmem:[%s215 + $0x40] sm:$0xff] %vm345, %v337
        %355 = vst.msk [vmem:[%s215 + $0x48] sm:$0xff] %vm345, %v338
        %356 = vst.msk [vmem:[%s215 + $0x50] sm:$0xff] %vm345, %v339
        %357 = vst.msk [vmem:[%s215 + $0x58] sm:$0xff] %vm345, %v340
        %358 = vst.msk [vmem:[%s215 + $0x60] sm:$0xff] %vm345, %v341
        %359 = vst.msk [vmem:[%s215 + $0x68] sm:$0xff] %vm345, %v342
        %360 = vst.msk [vmem:[%s215 + $0x70] sm:$0xff] %vm345, %v343
        %361 = vst.msk [vmem:[%s215 + $0x78] sm:$0xff] %vm345, %v344
        %s362 = smul.u32 16, %s22
        %p363 = scmp.lt.s32.totalorder %s21, 1
        %s364 = scalar_select %p363, %s21, 1
        %p365 = scmp.lt.s32.totalorder %s362, 31
        %s366 = scalar_select %p365, %s362, 31
        %s367 = smul.addr %s364, 32
        %s368 = sadd.s32 %s366, %s367
        %s369 = smul.addr %s368, 8
        %s370 = scalar_lea.vmem %s3, %s369
        // Predicated region
        $region37: #{tpu_custom_call.1} parent=31 // pred_check
          %p371 = pneg %p119
        $region38: #{tpu_custom_call.1} parent=31 // pred_check_branch
          %373 = sbr.rel (%p371) target = $region40
        $region39: #{tpu_custom_call.1} parent=31 // pred_region
          %s374 = smul.u32 16, %s22
        $region40: #{tpu_custom_call.1} parent=31 // pred_fallthru
          _
      $region32: #{tpu_custom_call.1} parent=5 // pred_fallthru
        _
      %p375 = scmp.le.s32.totalorder 2, %s12
      // Predicated region
      $region41: #{tpu_custom_call.1} parent=5 // pred_check
        %p376 = pneg %p375
      $region42: #{tpu_custom_call.1} parent=5 // pred_check_branch
        %378 = sbr.rel (%p376) target = $region44
      $region43: #{tpu_custom_call.1} parent=5 // pred_region
        %s379 = ssub.s32 %s12, 2
        // Predicated region
        $region45: #{tpu_custom_call.1} parent=43 // pred_check
          %p380 = pneg %p125
        $region46: #{tpu_custom_call.1} parent=43 // pred_check_branch
          %382 = sbr.rel (%p380) target = $region48
        $region47: #{tpu_custom_call.1} parent=43 // pred_region
          %s383 = smul.u32 16, %s24
          %p384 = scmp.lt.s32.totalorder %s23, 1
          %s385 = scalar_select %p384, %s23, 1
          %p386 = scmp.lt.s32.totalorder %s383, 31
          %s387 = scalar_select %p386, %s383, 31
          %s388 = smul.addr %s385, 32
          %s389 = sadd.s32 %s387, %s388
          %s390 = smul.addr %s389, 8
          %s391 = scalar_lea.vmem %s3, %s390
        $region48: #{tpu_custom_call.1} parent=43 // pred_fallthru
          _
      $region44: #{tpu_custom_call.1} parent=5 // pred_fallthru
        _
    $region6: #{tpu_custom_call.1} parent=1 // loop_footer
      %s16 = sadd.s32 1, %s12
    $region7: #{tpu_custom_call.1} parent=1 // loop_footer_branch
      %11 = sbr.rel target = $region3
    $region8: #{tpu_custom_call.1} parent=1 // loop_exit
      _
    %392 = vsyncpa [#allocation3], 1
    %s393 = scalar_lea.sflag [#allocation3], 1
    %394 = vsyncpa %s393, 1

</llo_original>
